<compile_context>
chip_gen: v5e
topology: v5e:2x2
jax: 0.10.0
libtpu: 0.0.40
codegen_flags: <defaults>
</compile_context>

<pallas_src>
import jax
import jax.numpy as jnp
import numpy as np
from jax.experimental import pallas as pl
from jax.experimental.pallas import tpu as pltpu


_LANE = 128
_SUBLANE = 8

# Total scoped VMEM the pipeline buffers may occupy.  Sized for the smallest
# chip (v7x: 64 MiB physical per TensorCore, leaving double-buffer + compiler
# scratch headroom); v5e/v6e (128 MiB) trivially fit the same cap.
_VMEM_BUDGET_BYTES = 40 << 20
# Below ~2K rows per tile (~1 MiB lane-padded x buffer) the ~0.35 us per-step
# pipeline overhead starts to dominate the DMA time.
_MIN_TILE_ROWS = 2048
# Prefer at least this many grid tiles when there is enough work so the
# "parallel" grid axis can be split across both v7x TensorCores.
_MIN_TILES_FOR_MEGACORE = 4

# Contract the last dim of both operands: (1, D) . (TB, D)^T -> (1, TB).
_TRANS_B_DIMS = (((1,), (1,)), ((), ()))


def covid_kernel(x_ref, w_ref, b_ref, o_ref):
    """One batch tile.

    x_ref : (TB, D_IN)  VMEM  streamed batch tile (rows on sublanes)
    w_ref : (1, D_IN)   VMEM  folded weight row (resident across the grid)
    b_ref : (1, 1)      SMEM  folded scalar bias
    o_ref : (1, 1, TB)  VMEM  lane-dense output row for this tile
    """
    # Trans-B dot gives the result already laid out along lanes (1, TB), so the
    # store and HBM writeback are lane-dense with no in-kernel transpose.  The
    # kernel is HBM-read-bound on x; the (under-utilized) MXU is off the
    # critical path.
    z = jax.lax.dot_general(
        w_ref[...], x_ref[...],
        dimension_numbers=_TRANS_B_DIMS,
        preferred_element_type=jnp.float32) + b_ref[0, 0]
    # Sigmoid: exp goes to the EUP.  Exact (non-approx) reciprocal on purpose,
    # to stay well inside the 1e-5 check against the float32 reference.
    o_ref[0] = 1.0 / (1.0 + jnp.exp(-z))


def _round_up(n, m):
    return ((n + m - 1) // m) * m


def _padded_vmem_bytes(tb, d_in):
    """Scoped-VMEM footprint of the pipeline buffers for a (tb, d_in) tile,
    counting TPU layout padding (lanes -> 128, sublanes -> 8) and the 2x
    double-buffering BlockSpec pipelining allocates."""
    d_pad = _round_up(d_in, _LANE)
    tb_pad = _round_up(tb, _LANE)
    x_bytes = 2 * tb * d_pad * 4             # streamed x tiles (lane-padded)
    w_bytes = 2 * _SUBLANE * d_pad * 4       # resident weight row
    o_bytes = 2 * _SUBLANE * tb_pad * 4      # (1,1,tb) out row, 8x sublane pad
    return x_bytes + w_bytes + o_bytes


def _choose_block_rows(B, d_in):
    """Largest batch tile whose padded, double-buffered footprint fits the VMEM
    budget; shrunk (never below _MIN_TILE_ROWS) if that would leave too few
    tiles to balance both v7x TensorCores."""
    b_sub = _round_up(B, _SUBLANE)
    d_pad = _round_up(d_in, _LANE)
    bytes_per_row = 2 * d_pad * 4 + 2 * _SUBLANE * 4   # x + out, double-buffered
    tb = (_VMEM_BUDGET_BYTES // bytes_per_row) // _LANE * _LANE
    tb = max(_LANE, tb)
    if tb >= b_sub:
        return b_sub
    if pl.cdiv(b_sub, tb) < _MIN_TILES_FOR_MEGACORE:
        balanced = _round_up(pl.cdiv(b_sub, _MIN_TILES_FOR_MEGACORE), _LANE)
        tb = min(tb, max(_MIN_TILE_ROWS, balanced))
    return tb


def fold_params(params):
    """Fold frozen Linear(D_IN,9) -> Linear(9,5) -> Linear(5,1) into one affine
    map.  Folding is done host-side in float64 so the re-association drift is
    far below the 1e-5 comparison tolerance; results are cast back to f32."""
    w_init = np.asarray(params["w_init"], dtype=np.float64)
    b_init = np.asarray(params["b_init"], dtype=np.float64)
    w1 = np.asarray(params["w1"], dtype=np.float64)
    b1 = np.asarray(params["b1"], dtype=np.float64)
    w2 = np.asarray(params["w2"], dtype=np.float64)
    b2 = np.asarray(params["b2"], dtype=np.float64)
    w_eff = w_init @ w1 @ w2                          # (D_IN, 1)
    b_eff = (b_init @ w1 + b1) @ w2 + b2              # (1, 1)
    return {
        "w_row": jnp.asarray(w_eff.T, dtype=jnp.float32),   # (1, D_IN)
        "b_eff": jnp.asarray(b_eff, dtype=jnp.float32),     # (1, 1)
    }


def _run_tiles(x_part, w_row, b_eff, tb, num_tiles):
    """pallas_call over `num_tiles` fully-in-bounds (tb, d_in) tiles of x_part.
    x_part may have extra trailing rows; the grid simply never visits them, so
    no host-side copy/pad of the bulk is needed."""
    _, d_in = x_part.shape
    rows = num_tiles * tb

    grid_spec = pltpu.PrefetchScalarGridSpec(
        num_scalar_prefetch=0,
        grid=(num_tiles,),
        in_specs=[
            pl.BlockSpec((tb, d_in), lambda i: (i, 0)),           # streamed x tile
            pl.BlockSpec((1, d_in), lambda i: (0, 0)),            # resident weights
            pl.BlockSpec(memory_space=pltpu.MemorySpace.SMEM),    # scalar bias
        ],
        out_specs=pl.BlockSpec((1, 1, tb), lambda i: (i, 0, 0)),  # lane-dense row
    )

    footprint = _padded_vmem_bytes(tb, d_in)
    vmem_limit = int(min(48 << 20, max(8 << 20, footprint + (4 << 20))))

    out = pl.pallas_call(
        covid_kernel,
        out_shape=jax.ShapeDtypeStruct((num_tiles, 1, tb), jnp.float32),
        grid_spec=grid_spec,
        compiler_params=pltpu.CompilerParams(
            dimension_semantics=("parallel",),   # batch tiles are independent
            vmem_limit_bytes=vmem_limit,
        ),
        cost_estimate=pl.CostEstimate(
            flops=2 * rows * d_in,
            transcendentals=rows,
            bytes_accessed=(rows * d_in + rows + d_in + 1) * 4,
        ),
    )(x_part, w_row, b_eff)
    return out.reshape(rows)


def covid_forward(x, folded, *, block_rows=None):
    """x: [B, D_IN] float32.  folded: output of fold_params().  Returns [B, 1]."""
    B, d_in = x.shape
    w_row = folded["w_row"]
    b_eff = folded["b_eff"]

    tb = block_rows if block_rows is not None else _choose_block_rows(B, d_in)
    tb = max(_SUBLANE, _round_up(min(int(tb), _round_up(B, _SUBLANE)), _SUBLANE))

    pieces = []
    n_full = B // tb
    if n_full > 0:
        # Main path: full x passed straight in, grid covers only full tiles.
        pieces.append(_run_tiles(x, w_row, b_eff, tb, n_full))
    tail = B - n_full * tb
    if tail > 0:
        # Pad only the small tail slice (< tb rows) to a sublane multiple and
        # process it as a single tile; padded rows are sliced off below.
        tb_tail = _round_up(tail, _SUBLANE)
        x_tail = jax.lax.slice_in_dim(x, n_full * tb, B, axis=0)
        if tb_tail != tail:
            x_tail = jnp.pad(x_tail, ((0, tb_tail - tail), (0, 0)))
        pieces.append(_run_tiles(x_tail, w_row, b_eff, tb_tail, 1)[:tail])

    out = pieces[0] if len(pieces) == 1 else jnp.concatenate(pieces)
    return out.reshape(B, 1)


def init_params(key, d_in):
    """Deterministic init mimicking PyTorch Linear default U(-1/sqrt(fan_in), +)."""
    ks = jax.random.split(key, 6)

    def linear(kw, kb, fan_in, fan_out):
        bound = 1.0 / jnp.sqrt(fan_in)
        w = jax.random.uniform(kw, (fan_in, fan_out), jnp.float32, -bound, bound)
        b = jax.random.uniform(kb, (1, fan_out), jnp.float32, -bound, bound)
        return w, b

    w_init, b_init = linear(ks[0], ks[1], d_in, 9)   # frozen init_model
    w1, b1 = linear(ks[2], ks[3], 9, 5)
    w2, b2 = linear(ks[4], ks[5], 5, 1)
    return {"w_init": w_init, "b_init": b_init,
            "w1": w1, "b1": b1, "w2": w2, "b2": b2}


def reference_forward(x, p):
    """Unfolded reference matching the original module's layer chain."""
    h = x @ p["w_init"] + p["b_init"]
    h = h @ p["w1"] + p["b1"]
    h = h @ p["w2"] + p["b2"]
    return jax.nn.sigmoid(h)


if __name__ == "__main__":
    key = jax.random.PRNGKey(0)
    k_x, k_p, k_x2 = jax.random.split(key, 3)

    D_IN = 32
    params = init_params(k_p, D_IN)
    folded = fold_params(params)

    # Small single-tile batch.
    B = 8
    x = jax.random.normal(k_x, (B, D_IN), jnp.float32)
    out = jax.block_until_ready(covid_forward(x, folded))
    ref = reference_forward(x, params)
    assert out.shape == (B, 1)
    assert jnp.allclose(out, ref, atol=1e-5, rtol=1e-5), "mismatch vs reference (B=8)"

    # Ragged batch exercising the multi-tile main path + padded tail tile
    # (tile forced small so the demo stays tiny).
    B2 = 300
    x2 = jax.random.normal(k_x2, (B2, D_IN), jnp.float32)
    out2 = jax.block_until_ready(covid_forward(x2, folded, block_rows=128))
    ref2 = reference_forward(x2, params)
    assert out2.shape == (B2, 1)
    assert jnp.allclose(out2, ref2, atol=1e-5, rtol=1e-5), "mismatch vs reference (B=300)"

    # Auto (VMEM-budget-derived) tile path on the same data.
    out3 = jax.block_until_ready(covid_forward(x2, folded))
    assert out3.shape == (B2, 1)
    assert jnp.allclose(out3, ref2, atol=1e-5, rtol=1e-5), "mismatch vs reference (auto tile)"

    print("KERNEL_OK")
</pallas_src>

<mosaic_0001>
module attributes {stable_mosaic.version = 11 : i64} {
  func.func @covid_kernel(%arg0: i32, %arg1: memref<8x32xf32, #tpu.memory_space<vmem>>, %arg2: memref<1x32xf32, #tpu.memory_space<vmem>>, %arg3: memref<1x1xf32, #tpu.memory_space<smem>>, %arg4: memref<1x1x8xf32, #tpu.memory_space<vmem>>) attributes {dimension_semantics = [#tpu.dimension_semantics<parallel>], iteration_bounds = array<i64: 1>, scalar_prefetch = 0 : i64, scratch_operands = 0 : i64, tpu.core_type = #tpu.core_type<tc>, window_params = [{transform_indices = @transform_0, window_bounds = array<i64: 8, 32>}, {pipeline_mode = #tpu.pipeline_mode<synchronous>, transform_indices = @transform_1, window_bounds = array<i64: 1, 32>}, {transform_indices = @transform_2, window_bounds = array<i64: 1, 1>}, {transform_indices = @transform_3, window_bounds = array<i64: 1, 1, 8>}]} {
    %c0 = arith.constant 0 : index
    %c0_0 = arith.constant 0 : index
    %0 = vector.load %arg2[%c0, %c0_0] : memref<1x32xf32, #tpu.memory_space<vmem>>, vector<1x32xf32>
    %c0_1 = arith.constant 0 : index
    %c0_2 = arith.constant 0 : index
    %1 = vector.load %arg1[%c0_1, %c0_2] : memref<8x32xf32, #tpu.memory_space<vmem>>, vector<8x32xf32>
    %cst = arith.constant dense<0.000000e+00> : vector<1x8xf32>
    %2 = tpu.matmul %0, %1, %cst {dimension_numbers = #tpu.dot_dimension_numbers<[1], [1], [0], [0], [0, 0, 1, 0], [], []>} : vector<1x32xf32>, vector<8x32xf32>, vector<1x8xf32> -> vector<1x8xf32>
    %c0_3 = arith.constant 0 : index
    %c0_4 = arith.constant 0 : index
    %3 = memref.load %arg3[%c0_3, %c0_4] : memref<1x1xf32, #tpu.memory_space<smem>>
    %4 = vector.broadcast %3 : f32 to vector<1x8xf32>
    %5 = arith.addf %2, %4 : vector<1x8xf32>
    %cst_5 = arith.constant 0.000000e+00 : f32
    %6 = vector.broadcast %cst_5 : f32 to vector<1x8xf32>
    %7 = arith.subf %6, %5 : vector<1x8xf32>
    %8 = math.exp %7 : vector<1x8xf32>
    %cst_6 = arith.constant 1.000000e+00 : f32
    %9 = vector.broadcast %cst_6 : f32 to vector<1x8xf32>
    %10 = arith.addf %9, %8 : vector<1x8xf32>
    %cst_7 = arith.constant 1.000000e+00 : f32
    %11 = vector.broadcast %cst_7 : f32 to vector<1x8xf32>
    %12 = arith.divf %11, %10 : vector<1x8xf32>
    %c0_8 = arith.constant 0 : index
    %c0_9 = arith.constant 0 : index
    %c0_10 = arith.constant 0 : index
    %13 = vector.load %arg4[%c0_8, %c0_9, %c0_10] : memref<1x1x8xf32, #tpu.memory_space<vmem>>, vector<1x1x8xf32>
    %14 = vector.shape_cast %13 : vector<1x1x8xf32> to vector<1x8xf32>
    %15 = vector.shape_cast %12 : vector<1x8xf32> to vector<1x1x8xf32>
    tpu.vector_store %arg4[%c0_8, %c0_9, %c0_10], %15 {strides = array<i32>} : memref<1x1x8xf32, #tpu.memory_space<vmem>>, vector<1x1x8xf32>,
    return
  }
  func.func @transform_0(%arg0: i32) -> (i32, i32) {
    %c0_i32 = arith.constant 0 : i32
    %c0_i32_0 = arith.constant 0 : i32
    return %arg0, %c0_i32 : i32, i32
  }
  func.func @transform_1(%arg0: i32) -> (i32, i32) {
    %c0_i32 = arith.constant 0 : i32
    %c0_i32_0 = arith.constant 0 : i32
    %c0_i32_1 = arith.constant 0 : i32
    return %c0_i32, %c0_i32_0 : i32, i32
  }
  func.func @transform_2(%arg0: i32) -> (i32, i32) {
    %c0_i32 = arith.constant 0 : i32
    %c0_i32_0 = arith.constant 0 : i32
    %c0_i32_1 = arith.constant 0 : i32
    return %c0_i32, %c0_i32_0 : i32, i32
  }
  func.func @transform_3(%arg0: i32) -> (i32, i32, i32) {
    %c0_i32 = arith.constant 0 : i32
    %c0_i32_0 = arith.constant 0 : i32
    %c0_i32_1 = arith.constant 0 : i32
    return %arg0, %c0_i32, %c0_i32_0 : i32, i32, i32
  }
}

</mosaic_0001>

<llo_original>
// kernel: tpu_custom_call.1
$region0: #{tpu_custom_call.1}
  #allocation0 [shape = 'u32[]', space=smem, size = 0x4, offset = 0x4, fixed_abs, tag = 'smem constant byte address 0x4 - core index']
  #allocation1 [shape = 'u32[72,128]{1,0:T(1,128)}', space=vmem, size = 0x9000, scoped, tag = 'internal scratch']
  #allocation2 [shape = 'f32[1,1]{1,0:T(1,128)S(6)}', space=smem, size = 0x200, scoped, tag = 'scoped memory for tpu_custom_call.1']
  %s0 = inlined_call_operand.hbm [shape: f32[8,32], index: 0, kind: input, shape index: {}]
  %s1 = inlined_call_operand.vmem [shape: f32[1,32], index: 1, kind: input, shape index: {}]
  %s2 = inlined_call_operand.<no memory space> [shape: f32[1,1], index: 2, kind: input, shape index: {}]
  %s3 = inlined_call_operand.hbm [shape: f32[1,1,8], index: 3, kind: output, shape index: {}]
  %s4 = sld [smem:[#allocation0]]
  $region26: #{tpu_custom_call.1} parent=0
    _
  %s6 = ssub.s32 1, %s4
  %s7 = scalar_select 0, %s6, %s4
  %8 = sst [smem:[#allocation2]] %s2
  $region1: #{tpu_custom_call.1} parent=0
    #allocation3 [shape = 'u8[4096]{0}', space=vmem, size = 0x1000, scoped, tag = 'input window, operand 0, single buffered']
    #allocation4 [shape = 's32[1]{0}', space=sflag, size = 0x4, scoped, tag = 'scoped memory for tpu_custom_call.1']
    #allocation5 [shape = 's32[1]{0}', space=sflag, size = 0x4, scoped, tag = 'scoped memory for tpu_custom_call.1']
    #allocation6 [shape = 'u8[512]{0}', space=vmem, size = 0x400, scoped, tag = 'output window, operand 0, single buffered']
    %9 = vsyncpa [#allocation4], 0
    %10 = vsyncpa [#allocation5], 0
    // Predicated region
    $region2: #{tpu_custom_call.1} parent=1 // pred_check
      _
    $region3: #{tpu_custom_call.1} parent=1 // pred_check_branch
      %12 = sbr.rel (0) target = $region5
    $region4: #{tpu_custom_call.1} parent=1 // pred_region
      %14 = vsyncadd [#allocation4], 0
      %s16 = sshll.u32 %s0, 4
      %s17 = int_to_ptr.hbm [resolvable:$true] %s16
      %s18 = sshll.u32 [#allocation3], 4
      %s19 = int_to_ptr.vmem [resolvable:$true] %s18
      %21 = dma.hbm_to_vmem [thread:$0]  %s17, 128, %s19, [#allocation4]
    $region5: #{tpu_custom_call.1} parent=1 // pred_fallthru
      _
    // Predicated region
    $region6: #{tpu_custom_call.1} parent=1 // pred_check
      _
    $region7: #{tpu_custom_call.1} parent=1 // pred_check_branch
      %23 = sbr.rel (0) target = $region9
    $region8: #{tpu_custom_call.1} parent=1 // pred_region
      _
    $region9: #{tpu_custom_call.1} parent=1 // pred_fallthru
      _
    // Predicated region
    $region10: #{tpu_custom_call.1} parent=1 // pred_check
      _
    $region11: #{tpu_custom_call.1} parent=1 // pred_check_branch
      %25 = sbr.rel (0) target = $region13
    $region12: #{tpu_custom_call.1} parent=1 // pred_region
      _
    $region13: #{tpu_custom_call.1} parent=1 // pred_fallthru
      _
    // Predicated region
    $region14: #{tpu_custom_call.1} parent=1 // pred_check
      _
    $region15: #{tpu_custom_call.1} parent=1 // pred_check_branch
      %27 = sbr.rel (0) target = $region17
    $region16: #{tpu_custom_call.1} parent=1 // pred_region
      %29 = dma.done [#allocation4], 128
    $region17: #{tpu_custom_call.1} parent=1 // pred_fallthru
      _
    %v30 = vld [vmem:[%s1] sm:$0x1]
    %v31 = vld [vmem:[#allocation3] sm:$0xff]
    %s32 = sld [smem:[#allocation2]]
    %v33 = vstv %s32
    %vm34 = vcmask 261120
    %v36 = vsel %vm34, %v30, 0
    %v39 = vsel %vm34, %v31, 0
    %41 = vmatpush.xpose.msra.mxu0 0.0
    %42 = vmatpush.xpose.msra.mxu0 0.0
    %43 = vmatpush.xpose.msra.mxu0 0.0
    %44 = vmatpush.xpose.msra.mxu0 0.0
    %45 = vmatpush.xpose.msra.mxu0 0.0
    %46 = vmatpush.xpose.msra.mxu0 0.0
    %47 = vmatpush.xpose.msra.mxu0 0.0
    %48 = vmatpush.xpose.msra.mxu0 0.0
    %49 = vmatpush.xpose.msra.mxu0 0.0
    %50 = vmatpush.xpose.msra.mxu0 0.0
    %51 = vmatpush.xpose.msra.mxu0 0.0
    %52 = vmatpush.xpose.msra.mxu0 0.0
    %53 = vmatpush.xpose.msra.mxu0 0.0
    %54 = vmatpush.xpose.msra.mxu0 0.0
    %55 = vmatpush.xpose.msra.mxu0 0.0
    %56 = vmatpush.xpose.msra.mxu0 %v39
    %57 = vmatmul.f32.gmra.mxu0 %v36
    %v58 = vpop.f32.mrf.mxu0
    %v59 = vadd.f32 %v33, %v58
    %60 = vdwg.mxu0
    %v61 = vsub.f32 0.0, %v59
    %v62 = vmul.f32 %v61, 1.442695
    %v63 = vpow.pop %v62
    %v64 = vadd.f32 %v63, 1.0
    %v65 = vrcp.pop %v64
    %v66 = vmul.f32 %v64, %v65
    %v67 = vsub.f32 1.0, %v66
    %v68 = vmul.f32 %v65, %v67
    %v69 = vadd.f32 %v65, %v68
    %vm70 = vweird.f32 %v64
    %vm71 = vweird.f32 %v65
    %vm72 = vmor %vm70, %vm71
    %v73 = vsel %vm72, %v65, %v69
    %v74 = vand.u32 2147483647, %v64
    %vm75 = vcmp.eq.f32.partialorder %v74, 8.507059e+37
    %v76 = vand.u32 %v64, 2147483648
    %v77 = vor.u32 1.1754944e-38, %v76
    %v78 = vsel %vm75, %v77, %v73
    %v79 = vmul.f32 1.0, %v78
    %vm80 = vcmask 57344
    %81 = vst.msk [vmem:[#allocation6] sm:$0x1] %vm80, %v79
    // Predicated region
    $region18: #{tpu_custom_call.1} parent=1 // pred_check
      _
    $region19: #{tpu_custom_call.1} parent=1 // pred_check_branch
      %83 = sbr.rel (0) target = $region21
    $region20: #{tpu_custom_call.1} parent=1 // pred_region
      %85 = vsyncadd [#allocation5], 0
      %s87 = sshll.u32 [#allocation6], 4
      %s88 = int_to_ptr.vmem [resolvable:$true] %s87
      %s89 = sshll.u32 %s3, 4
      %s90 = int_to_ptr.hbm [resolvable:$true] %s89
      %92 = dma.vmem_to_hbm [thread:$0]  %s88, 16, %s90, [#allocation5]
    $region21: #{tpu_custom_call.1} parent=1 // pred_fallthru
      _
    // Predicated region
    $region22: #{tpu_custom_call.1} parent=1 // pred_check
      _
    $region23: #{tpu_custom_call.1} parent=1 // pred_check_branch
      %94 = sbr.rel (0) target = $region25
    $region24: #{tpu_custom_call.1} parent=1 // pred_region
      %96 = dma.done [#allocation5], 16
    $region25: #{tpu_custom_call.1} parent=1 // pred_fallthru
      _
    %97 = vsyncpa [#allocation4], 1
    %98 = vsyncpa [#allocation5], 1

</llo_original>
